<compile_context>
chip_gen: v7x
topology: tpu7x:2x2x1
jax: 0.10.0
libtpu: 0.0.40
codegen_flags: <defaults>
</compile_context>

<pallas_src>
import jax
import jax.numpy as jnp
from jax.experimental import pallas as pl
from jax.experimental.pallas import tpu as pltpu


def _critic_kernel(z0t_ref, tdt_ref, w1_ref, w2_ref, w3a_ref, w3b_ref, w4_ref,
                   b1_ref, b2_ref, b3_ref, b4_ref, out_ref):
    f32 = jnp.float32
    cdtype = w3a_ref.dtype  # compute dtype of the matmul operands (f32 or bf16)

    # lin1 / lin2, feature-major: [H, K] @ [K, tb] -> [H, tb]; bias is a
    # [H, 1] column broadcast over the lane axis. Accumulate in f32.
    h1 = jnp.dot(w1_ref[...], z0t_ref[...],
                 preferred_element_type=f32) + b1_ref[...]
    h2 = jnp.dot(w2_ref[...], tdt_ref[...],
                 preferred_element_type=f32) + b2_ref[...]

    # relu(cat(out1, out2)) followed by lin3 == w3a @ relu(out1) + w3b @ relu(out2)
    a1 = jnp.maximum(h1, 0.0).astype(cdtype)
    a2 = jnp.maximum(h2, 0.0).astype(cdtype)
    h3 = (jnp.dot(w3a_ref[...], a1, preferred_element_type=f32)
          + jnp.dot(w3b_ref[...], a2, preferred_element_type=f32)
          + b3_ref[...])
    a3 = jnp.maximum(h3, 0.0).astype(cdtype)

    # lin4: [1, H] @ [H, tb] -> lane-dense [1, tb] row; scalar bias from SMEM.
    out = jnp.dot(w4_ref[...], a3, preferred_element_type=f32) + b4_ref[0]
    out_ref[...] = out


def _ceil_to(x, m):
    return -(-x // m) * m


def _pick_batch_tile(B):
    """Batch tile (lane/N dimension): multiple of 256 (lane-dense, MXU-wide),
    big enough to amortize the ~0.35us per-grid-step overhead, and chosen so
    large batches split into an EVEN number of tiles (v7x shards the
    'parallel' axis over 2 TensorCores; odd counts give a 2:1 imbalance)."""
    if B <= 2048:
        return _ceil_to(B, 256)                      # single tile
    nb = _ceil_to(pl.cdiv(B, 2048), 2)               # ~2048 rows/tile, even count
    return _ceil_to(pl.cdiv(B, nb), 256)


def prepare_params(params, *, compute_dtype=jnp.float32):
    """One-time weight prep (hoisted out of the forward path).

    Splits lin3 into the halves consuming lin1/lin2 outputs (replaces the
    torch.cat), reshapes biases to feature-major columns, and casts the matmul
    operands to `compute_dtype` (bf16 halves HBM/vreg traffic on every
    generation, incl. v5e, whose MXU is bf16-native).  Biases stay f32: they
    are added to the f32 accumulator."""
    w1, b1, w2, b2, w3, b3, w4, b4 = params
    hidden = w1.shape[0]
    return (
        w1.astype(compute_dtype),              # [H, z_dim]
        w2.astype(compute_dtype),              # [H, p_feat]
        w3[:, :hidden].astype(compute_dtype),  # [H, H]  (consumes lin1 out)
        w3[:, hidden:].astype(compute_dtype),  # [H, H]  (consumes lin2 out)
        w4.astype(compute_dtype),              # [1, H]
        b1.reshape(hidden, 1).astype(jnp.float32),
        b2.reshape(hidden, 1).astype(jnp.float32),
        b3.reshape(hidden, 1).astype(jnp.float32),
        b4.reshape(1).astype(jnp.float32),     # scalar -> SMEM
    )


def critic_forward(z0, trades_data, prepared, *, batch_tile=None):
    """Critic forward pass. Returns shape [B] (== lin4(...).squeeze(-1))."""
    w1, w2, w3a, w3b, w4, b1c, b2c, b3c, b4s = prepared
    B, z_dim = z0.shape
    _, p_feat = trades_data.shape
    hidden = w1.shape[0]
    cdtype = w1.dtype

    tb = batch_tile if batch_tile is not None else _pick_batch_tile(B)
    nb = pl.cdiv(B, tb)
    Bp = nb * tb

    # Feature-major activations: the batch becomes the lane/N dimension.
    # Single fused transpose(+cast) per input; pad only if the batch is ragged.
    z0t = z0.T.astype(cdtype)                   # [z_dim, B]
    tdt = trades_data.T.astype(cdtype)          # [p_feat, B]
    if Bp != B:
        z0t = jnp.pad(z0t, ((0, 0), (0, Bp - B)))
        tdt = jnp.pad(tdt, ((0, 0), (0, Bp - B)))

    flops = 2 * Bp * (hidden * z_dim + hidden * p_feat
                      + 2 * hidden * hidden + hidden)
    w_bytes = sum(int(a.size) * a.dtype.itemsize
                  for a in (w1, w2, w3a, w3b, w4, b1c, b2c, b3c)) + 4
    bytes_accessed = (int(z0t.size) * z0t.dtype.itemsize
                      + int(tdt.size) * tdt.dtype.itemsize
                      + Bp * 4 + nb * w_bytes)

    def act_map(i):     # activation / output tiles walk the batch axis
        return (0, i)

    def fixed_map(i):   # grid-invariant weight / bias blocks
        return (0, 0)

    out = pl.pallas_call(
        _critic_kernel,
        out_shape=jax.ShapeDtypeStruct((1, Bp), jnp.float32),
        grid_spec=pltpu.PrefetchScalarGridSpec(
            num_scalar_prefetch=0,
            grid=(nb,),
            in_specs=[
                pl.BlockSpec((z_dim, tb), act_map),                 # z0^T tile
                pl.BlockSpec((p_feat, tb), act_map),                # trades^T tile
                pl.BlockSpec((hidden, z_dim), fixed_map),           # W1
                pl.BlockSpec((hidden, p_feat), fixed_map),          # W2
                pl.BlockSpec((hidden, hidden), fixed_map),          # W3[:, :H]
                pl.BlockSpec((hidden, hidden), fixed_map),          # W3[:, H:]
                pl.BlockSpec((1, hidden), fixed_map),               # W4
                pl.BlockSpec((hidden, 1), fixed_map),               # b1
                pl.BlockSpec((hidden, 1), fixed_map),               # b2
                pl.BlockSpec((hidden, 1), fixed_map),               # b3
                pl.BlockSpec(memory_space=pltpu.MemorySpace.SMEM),  # b4 scalar
            ],
            out_specs=pl.BlockSpec((1, tb), act_map),               # lane-dense row
        ),
        compiler_params=pltpu.CompilerParams(
            dimension_semantics=("parallel",)),
        cost_estimate=pl.CostEstimate(
            flops=flops, transcendentals=0, bytes_accessed=bytes_accessed),
    )(z0t, tdt, w1, w2, w3a, w3b, w4, b1c, b2c, b3c, b4s)

    # squeeze(-1) of lin4 + drop batch padding.
    return out.reshape(-1)[:B]


def init_params(key, z_dim, hidden_dim, n_traded_sym):
    """PyTorch-Linear-style init (uniform +-1/sqrt(fan_in)), PyTorch layout
    (weights are [out_features, in_features])."""
    p_feat = 3 * n_traded_sym + 2

    def linear(key, fan_in, fan_out):
        kw, kb = jax.random.split(key)
        bound = 1.0 / jnp.sqrt(float(fan_in))
        w = jax.random.uniform(kw, (fan_out, fan_in), jnp.float32, -bound, bound)
        b = jax.random.uniform(kb, (fan_out,), jnp.float32, -bound, bound)
        return w, b

    k1, k2, k3, k4 = jax.random.split(key, 4)
    w1, b1 = linear(k1, z_dim, hidden_dim)
    w2, b2 = linear(k2, p_feat, hidden_dim)
    w3, b3 = linear(k3, 2 * hidden_dim, hidden_dim)
    w4, b4 = linear(k4, hidden_dim, 1)
    return (w1, b1, w2, b2, w3, b3, w4, b4)


def critic_reference(z0, trades_data, params):
    """Plain-JAX reference matching the PyTorch forward exactly."""
    w1, b1, w2, b2, w3, b3, w4, b4 = params
    out1 = z0 @ w1.T + b1
    out2 = trades_data @ w2.T + b2
    out = jax.nn.relu(jnp.concatenate((out1, out2), axis=-1))
    out = jax.nn.relu(out @ w3.T + b3)
    return (out @ w4.T + b4)[..., 0]


if __name__ == "__main__":
    # Module-consistent shapes.
    B = 512
    z_dim = 32
    hidden_dim = 32
    n_traded_sym = 4  # -> prev_step_features = 14

    key = jax.random.PRNGKey(0)
    kp, kz, kt = jax.random.split(key, 3)

    params = init_params(kp, z_dim, hidden_dim, n_traded_sym)
    z0 = jax.random.normal(kz, (B, z_dim), jnp.float32)
    trades = jax.random.normal(kt, (B, 3 * n_traded_sym + 2), jnp.float32)

    ref = critic_reference(z0, trades, params)

    # f32 path (default tile -> single 512-wide lane-dense tile).
    prep_f32 = prepare_params(params)
    out = jax.block_until_ready(critic_forward(z0, trades, prep_f32))
    assert out.shape == (B,), out.shape
    assert jnp.allclose(out, ref, atol=1e-4, rtol=1e-4), \
        float(jnp.max(jnp.abs(out - ref)))

    # Ragged batch + explicit 128-wide tile -> grid of 3 steps, exercises the
    # zero-padding path and BlockSpec pipelining.
    out2 = jax.block_until_ready(
        critic_forward(z0[:300], trades[:300], prep_f32, batch_tile=128))
    ref2 = critic_reference(z0[:300], trades[:300], params)
    assert out2.shape == (300,), out2.shape
    assert jnp.allclose(out2, ref2, atol=1e-4, rtol=1e-4)

    # True bf16 MXU path: weights AND activations in bf16, f32 accumulation.
    prep_bf16 = prepare_params(params, compute_dtype=jnp.bfloat16)
    out3 = jax.block_until_ready(critic_forward(z0, trades, prep_bf16))
    assert out3.shape == (B,), out3.shape
    assert jnp.allclose(out3, ref, atol=1e-1, rtol=1e-1), \
        float(jnp.max(jnp.abs(out3 - ref)))

    print("KERNEL_OK")
</pallas_src>

<mosaic_0001>
module attributes {stable_mosaic.version = 11 : i64} {
  func.func @_critic_kernel(%arg0: i32, %arg1: memref<32x512xf32, #tpu.memory_space<vmem>>, %arg2: memref<14x512xf32, #tpu.memory_space<vmem>>, %arg3: memref<32x32xf32, #tpu.memory_space<vmem>>, %arg4: memref<32x14xf32, #tpu.memory_space<vmem>>, %arg5: memref<32x32xf32, #tpu.memory_space<vmem>>, %arg6: memref<32x32xf32, #tpu.memory_space<vmem>>, %arg7: memref<1x32xf32, #tpu.memory_space<vmem>>, %arg8: memref<32x1xf32, #tpu.memory_space<vmem>>, %arg9: memref<32x1xf32, #tpu.memory_space<vmem>>, %arg10: memref<32x1xf32, #tpu.memory_space<vmem>>, %arg11: memref<1xf32, #tpu.memory_space<smem>>, %arg12: memref<1x512xf32, #tpu.memory_space<vmem>>) attributes {dimension_semantics = [#tpu.dimension_semantics<parallel>], iteration_bounds = array<i64: 1>, scalar_prefetch = 0 : i64, scratch_operands = 0 : i64, tpu.core_type = #tpu.core_type<tc>, window_params = [{transform_indices = @transform_0, window_bounds = array<i64: 32, 512>}, {transform_indices = @transform_1, window_bounds = array<i64: 14, 512>}, {pipeline_mode = #tpu.pipeline_mode<synchronous>, transform_indices = @transform_2, window_bounds = array<i64: 32, 32>}, {pipeline_mode = #tpu.pipeline_mode<synchronous>, transform_indices = @transform_3, window_bounds = array<i64: 32, 14>}, {pipeline_mode = #tpu.pipeline_mode<synchronous>, transform_indices = @transform_4, window_bounds = array<i64: 32, 32>}, {pipeline_mode = #tpu.pipeline_mode<synchronous>, transform_indices = @transform_5, window_bounds = array<i64: 32, 32>}, {pipeline_mode = #tpu.pipeline_mode<synchronous>, transform_indices = @transform_6, window_bounds = array<i64: 1, 32>}, {pipeline_mode = #tpu.pipeline_mode<synchronous>, transform_indices = @transform_7, window_bounds = array<i64: 32, 1>}, {pipeline_mode = #tpu.pipeline_mode<synchronous>, transform_indices = @transform_8, window_bounds = array<i64: 32, 1>}, {pipeline_mode = #tpu.pipeline_mode<synchronous>, transform_indices = @transform_9, window_bounds = array<i64: 32, 1>}, {transform_indices = @transform_10, window_bounds = array<i64: 1>}, {transform_indices = @transform_11, window_bounds = array<i64: 1, 512>}]} {
    %c0 = arith.constant 0 : index
    %c0_0 = arith.constant 0 : index
    %0 = vector.load %arg3[%c0, %c0_0] : memref<32x32xf32, #tpu.memory_space<vmem>>, vector<32x32xf32>
    %c0_1 = arith.constant 0 : index
    %c0_2 = arith.constant 0 : index
    %1 = vector.load %arg1[%c0_1, %c0_2] : memref<32x512xf32, #tpu.memory_space<vmem>>, vector<32x512xf32>
    %cst = arith.constant dense<0.000000e+00> : vector<32x512xf32>
    %2 = tpu.matmul %0, %1, %cst {dimension_numbers = #tpu.dot_dimension_numbers<[1], [0], [0], [1], [0, 0, 1, 1], [], []>} : vector<32x32xf32>, vector<32x512xf32>, vector<32x512xf32> -> vector<32x512xf32>
    %c0_3 = arith.constant 0 : index
    %c0_4 = arith.constant 0 : index
    %3 = vector.load %arg8[%c0_3, %c0_4] : memref<32x1xf32, #tpu.memory_space<vmem>>, vector<32x1xf32>
    %4 = vector.broadcast %3 : vector<32x1xf32> to vector<32x512xf32>
    %5 = arith.addf %2, %4 : vector<32x512xf32>
    %c0_5 = arith.constant 0 : index
    %c0_6 = arith.constant 0 : index
    %6 = vector.load %arg4[%c0_5, %c0_6] : memref<32x14xf32, #tpu.memory_space<vmem>>, vector<32x14xf32>
    %c0_7 = arith.constant 0 : index
    %c0_8 = arith.constant 0 : index
    %7 = vector.load %arg2[%c0_7, %c0_8] : memref<14x512xf32, #tpu.memory_space<vmem>>, vector<14x512xf32>
    %cst_9 = arith.constant dense<0.000000e+00> : vector<32x512xf32>
    %8 = tpu.matmul %6, %7, %cst_9 {dimension_numbers = #tpu.dot_dimension_numbers<[1], [0], [0], [1], [0, 0, 1, 1], [], []>} : vector<32x14xf32>, vector<14x512xf32>, vector<32x512xf32> -> vector<32x512xf32>
    %c0_10 = arith.constant 0 : index
    %c0_11 = arith.constant 0 : index
    %9 = vector.load %arg9[%c0_10, %c0_11] : memref<32x1xf32, #tpu.memory_space<vmem>>, vector<32x1xf32>
    %10 = vector.broadcast %9 : vector<32x1xf32> to vector<32x512xf32>
    %11 = arith.addf %8, %10 : vector<32x512xf32>
    %cst_12 = arith.constant 0.000000e+00 : f32
    %12 = vector.broadcast %cst_12 : f32 to vector<32x512xf32>
    %13 = arith.maximumf %5, %12 : vector<32x512xf32>
    %cst_13 = arith.constant 0.000000e+00 : f32
    %14 = vector.broadcast %cst_13 : f32 to vector<32x512xf32>
    %15 = arith.maximumf %11, %14 : vector<32x512xf32>
    %c0_14 = arith.constant 0 : index
    %c0_15 = arith.constant 0 : index
    %16 = vector.load %arg5[%c0_14, %c0_15] : memref<32x32xf32, #tpu.memory_space<vmem>>, vector<32x32xf32>
    %cst_16 = arith.constant dense<0.000000e+00> : vector<32x512xf32>
    %17 = tpu.matmul %16, %13, %cst_16 {dimension_numbers = #tpu.dot_dimension_numbers<[1], [0], [0], [1], [0, 0, 1, 1], [], []>} : vector<32x32xf32>, vector<32x512xf32>, vector<32x512xf32> -> vector<32x512xf32>
    %c0_17 = arith.constant 0 : index
    %c0_18 = arith.constant 0 : index
    %18 = vector.load %arg6[%c0_17, %c0_18] : memref<32x32xf32, #tpu.memory_space<vmem>>, vector<32x32xf32>
    %cst_19 = arith.constant dense<0.000000e+00> : vector<32x512xf32>
    %19 = tpu.matmul %18, %15, %cst_19 {dimension_numbers = #tpu.dot_dimension_numbers<[1], [0], [0], [1], [0, 0, 1, 1], [], []>} : vector<32x32xf32>, vector<32x512xf32>, vector<32x512xf32> -> vector<32x512xf32>
    %20 = arith.addf %17, %19 : vector<32x512xf32>
    %c0_20 = arith.constant 0 : index
    %c0_21 = arith.constant 0 : index
    %21 = vector.load %arg10[%c0_20, %c0_21] : memref<32x1xf32, #tpu.memory_space<vmem>>, vector<32x1xf32>
    %22 = vector.broadcast %21 : vector<32x1xf32> to vector<32x512xf32>
    %23 = arith.addf %20, %22 : vector<32x512xf32>
    %cst_22 = arith.constant 0.000000e+00 : f32
    %24 = vector.broadcast %cst_22 : f32 to vector<32x512xf32>
    %25 = arith.maximumf %23, %24 : vector<32x512xf32>
    %c0_23 = arith.constant 0 : index
    %c0_24 = arith.constant 0 : index
    %26 = vector.load %arg7[%c0_23, %c0_24] : memref<1x32xf32, #tpu.memory_space<vmem>>, vector<1x32xf32>
    %cst_25 = arith.constant dense<0.000000e+00> : vector<1x512xf32>
    %27 = tpu.matmul %26, %25, %cst_25 {dimension_numbers = #tpu.dot_dimension_numbers<[1], [0], [0], [1], [0, 0, 1, 1], [], []>} : vector<1x32xf32>, vector<32x512xf32>, vector<1x512xf32> -> vector<1x512xf32>
    %c0_26 = arith.constant 0 : index
    %28 = memref.load %arg11[%c0_26] : memref<1xf32, #tpu.memory_space<smem>>
    %29 = vector.broadcast %28 : f32 to vector<1x512xf32>
    %30 = arith.addf %27, %29 : vector<1x512xf32>
    %c0_27 = arith.constant 0 : index
    %c0_28 = arith.constant 0 : index
    %31 = vector.load %arg12[%c0_27, %c0_28] : memref<1x512xf32, #tpu.memory_space<vmem>>, vector<1x512xf32>
    tpu.vector_store %arg12[%c0_27, %c0_28], %30 {strides = array<i32>} : memref<1x512xf32, #tpu.memory_space<vmem>>, vector<1x512xf32>,
    return
  }
  func.func @transform_0(%arg0: i32) -> (i32, i32) {
    %c0_i32 = arith.constant 0 : i32
    %c0_i32_0 = arith.constant 0 : i32
    return %c0_i32, %arg0 : i32, i32
  }
  func.func @transform_1(%arg0: i32) -> (i32, i32) {
    %c0_i32 = arith.constant 0 : i32
    %c0_i32_0 = arith.constant 0 : i32
    return %c0_i32, %arg0 : i32, i32
  }
  func.func @transform_2(%arg0: i32) -> (i32, i32) {
    %c0_i32 = arith.constant 0 : i32
    %c0_i32_0 = arith.constant 0 : i32
    %c0_i32_1 = arith.constant 0 : i32
    return %c0_i32, %c0_i32_0 : i32, i32
  }
  func.func @transform_3(%arg0: i32) -> (i32, i32) {
    %c0_i32 = arith.constant 0 : i32
    %c0_i32_0 = arith.constant 0 : i32
    %c0_i32_1 = arith.constant 0 : i32
    return %c0_i32, %c0_i32_0 : i32, i32
  }
  func.func @transform_4(%arg0: i32) -> (i32, i32) {
    %c0_i32 = arith.constant 0 : i32
    %c0_i32_0 = arith.constant 0 : i32
    %c0_i32_1 = arith.constant 0 : i32
    return %c0_i32, %c0_i32_0 : i32, i32
  }
  func.func @transform_5(%arg0: i32) -> (i32, i32) {
    %c0_i32 = arith.constant 0 : i32
    %c0_i32_0 = arith.constant 0 : i32
    %c0_i32_1 = arith.constant 0 : i32
    return %c0_i32, %c0_i32_0 : i32, i32
  }
  func.func @transform_6(%arg0: i32) -> (i32, i32) {
    %c0_i32 = arith.constant 0 : i32
    %c0_i32_0 = arith.constant 0 : i32
    %c0_i32_1 = arith.constant 0 : i32
    return %c0_i32, %c0_i32_0 : i32, i32
  }
  func.func @transform_7(%arg0: i32) -> (i32, i32) {
    %c0_i32 = arith.constant 0 : i32
    %c0_i32_0 = arith.constant 0 : i32
    %c0_i32_1 = arith.constant 0 : i32
    return %c0_i32, %c0_i32_0 : i32, i32
  }
  func.func @transform_8(%arg0: i32) -> (i32, i32) {
    %c0_i32 = arith.constant 0 : i32
    %c0_i32_0 = arith.constant 0 : i32
    %c0_i32_1 = arith.constant 0 : i32
    return %c0_i32, %c0_i32_0 : i32, i32
  }
  func.func @transform_9(%arg0: i32) -> (i32, i32) {
    %c0_i32 = arith.constant 0 : i32
    %c0_i32_0 = arith.constant 0 : i32
    %c0_i32_1 = arith.constant 0 : i32
    return %c0_i32, %c0_i32_0 : i32, i32
  }
  func.func @transform_10(%arg0: i32) -> i32 {
    %c0_i32 = arith.constant 0 : i32
    %c0_i32_0 = arith.constant 0 : i32
    return %c0_i32 : i32
  }
  func.func @transform_11(%arg0: i32) -> (i32, i32) {
    %c0_i32 = arith.constant 0 : i32
    %c0_i32_0 = arith.constant 0 : i32
    return %c0_i32, %arg0 : i32, i32
  }
}

</mosaic_0001>

<llo_original>
// kernel: tpu_custom_call.1
$region0: #{tpu_custom_call.1}
  #allocation0 [shape = 'u32[]', space=smem, size = 0x4, offset = 0x4, fixed_abs, tag = 'smem constant byte address 0x4 - core index']
  #allocation1 [shape = 'u32[144,128]{1,0:T(1,128)}', space=vmem, size = 0x12000, scoped, tag = 'internal scratch']
  #allocation2 [shape = 'f32[1]{0:T(128)S(6)}', space=smem, size = 0x200, scoped, tag = 'scoped memory for tpu_custom_call.1']
  %s0 = inlined_call_operand.vmem [shape: f32[32,512], index: 0, kind: input, shape index: {}]
  %s1 = inlined_call_operand.hbm [shape: f32[14,512], index: 1, kind: input, shape index: {}]
  %s2 = inlined_call_operand.hbm [shape: f32[32,32], index: 2, kind: input, shape index: {}]
  %s3 = inlined_call_operand.vmem [shape: f32[32,14], index: 3, kind: input, shape index: {}]
  %s4 = inlined_call_operand.vmem [shape: f32[32,32], index: 4, kind: input, shape index: {}]
  %s5 = inlined_call_operand.hbm [shape: f32[32,32], index: 5, kind: input, shape index: {}]
  %s6 = inlined_call_operand.vmem [shape: f32[1,32], index: 6, kind: input, shape index: {}]
  %s7 = inlined_call_operand.vmem [shape: f32[32,1], index: 7, kind: input, shape index: {}]
  %s8 = inlined_call_operand.vmem [shape: f32[32,1], index: 8, kind: input, shape index: {}]
  %s9 = inlined_call_operand.vmem [shape: f32[32,1], index: 9, kind: input, shape index: {}]
  %s10 = inlined_call_operand.<no memory space> [shape: f32[1], index: 10, kind: input, shape index: {}]
  %s11 = inlined_call_operand.hbm [shape: f32[1,512], index: 11, kind: output, shape index: {}]
  %s12 = sld [smem:[#allocation0]]
  $region66: #{tpu_custom_call.1} parent=0
    _
  %s14 = ssub.s32 1, %s12
  %s15 = scalar_select 0, %s14, %s12
  %16 = sst [smem:[#allocation2]] %s10
  $region1: #{tpu_custom_call.1} parent=0
    #allocation3 [shape = 'u8[32768]{0}', space=vmem, size = 0x8000, scoped, tag = 'input window, operand 1, single buffered']
    #allocation4 [shape = 's32[1]{0}', space=sflag, size = 0x4, scoped, tag = 'scoped memory for tpu_custom_call.1']
    #allocation5 [shape = 's32[1]{0}', space=sflag, size = 0x4, scoped, tag = 'scoped memory for tpu_custom_call.1']
    #allocation6 [shape = 'u8[16384]{0}', space=vmem, size = 0x4000, scoped, tag = 'input window, operand 2, single buffered']
    #allocation7 [shape = 's32[1]{0}', space=sflag, size = 0x4, scoped, tag = 'scoped memory for tpu_custom_call.1']
    #allocation8 [shape = 'u8[16384]{0}', space=vmem, size = 0x4000, scoped, tag = 'input window, operand 5, single buffered']
    #allocation9 [shape = 'u8[2048]{0}', space=vmem, size = 0x800, scoped, tag = 'output window, operand 0, single buffered']
    %17 = vsyncpa [#allocation4], 0
    %18 = vsyncpa [#allocation7], 0
    %19 = vsyncpa [#allocation5], 0
    // Predicated region
    $region2: #{tpu_custom_call.1} parent=1 // pred_check
      _
    $region3: #{tpu_custom_call.1} parent=1 // pred_check_branch
      %21 = sbr.rel (0) target = $region5
    $region4: #{tpu_custom_call.1} parent=1 // pred_region
      _
    $region5: #{tpu_custom_call.1} parent=1 // pred_fallthru
      _
    // Predicated region
    $region6: #{tpu_custom_call.1} parent=1 // pred_check
      _
    $region7: #{tpu_custom_call.1} parent=1 // pred_check_branch
      %23 = sbr.rel (0) target = $region9
    $region8: #{tpu_custom_call.1} parent=1 // pred_region
      %s25 = ssub.s32 1024, 1024
      %26 = vsyncadd [#allocation4], %s25
      %s27 = sshll.u32 [#allocation3], 4
      %s28 = int_to_ptr.vmem [resolvable:$true] %s27
      %33 = dma.hbm_to_vmem [thread:$0]  %s1, 1024, %s28, [#allocation4], 512, 512, 32
    $region9: #{tpu_custom_call.1} parent=1 // pred_fallthru
      _
    // Predicated region
    $region10: #{tpu_custom_call.1} parent=1 // pred_check
      _
    $region11: #{tpu_custom_call.1} parent=1 // pred_check_branch
      %35 = sbr.rel (0) target = $region13
    $region12: #{tpu_custom_call.1} parent=1 // pred_region
      %s37 = ssub.s32 512, 512
      %38 = vsyncadd [#allocation7], %s37
      %s39 = sshll.u32 [#allocation6], 4
      %s40 = int_to_ptr.vmem [resolvable:$true] %s39
      %45 = dma.hbm_to_vmem [thread:$0]  %s2, 512, %s40, [#allocation7], 128, 128, 8
    $region13: #{tpu_custom_call.1} parent=1 // pred_fallthru
      _
    // Predicated region
    $region14: #{tpu_custom_call.1} parent=1 // pred_check
      _
    $region15: #{tpu_custom_call.1} parent=1 // pred_check_branch
      %47 = sbr.rel (0) target = $region17
    $region16: #{tpu_custom_call.1} parent=1 // pred_region
      _
    $region17: #{tpu_custom_call.1} parent=1 // pred_fallthru
      _
    // Predicated region
    $region18: #{tpu_custom_call.1} parent=1 // pred_check
      _
    $region19: #{tpu_custom_call.1} parent=1 // pred_check_branch
      %49 = sbr.rel (0) target = $region21
    $region20: #{tpu_custom_call.1} parent=1 // pred_region
      _
    $region21: #{tpu_custom_call.1} parent=1 // pred_fallthru
      _
    // Predicated region
    $region22: #{tpu_custom_call.1} parent=1 // pred_check
      _
    $region23: #{tpu_custom_call.1} parent=1 // pred_check_branch
      %51 = sbr.rel (0) target = $region25
    $region24: #{tpu_custom_call.1} parent=1 // pred_region
      %s53 = ssub.s32 512, 512
      %54 = vsyncadd [#allocation7], %s53
      %s55 = sshll.u32 [#allocation8], 4
      %s56 = int_to_ptr.vmem [resolvable:$true] %s55
      %61 = dma.hbm_to_vmem [thread:$0]  %s5, 512, %s56, [#allocation7], 128, 128, 8
    $region25: #{tpu_custom_call.1} parent=1 // pred_fallthru
      _
    // Predicated region
    $region26: #{tpu_custom_call.1} parent=1 // pred_check
      _
    $region27: #{tpu_custom_call.1} parent=1 // pred_check_branch
      %63 = sbr.rel (0) target = $region29
    $region28: #{tpu_custom_call.1} parent=1 // pred_region
      _
    $region29: #{tpu_custom_call.1} parent=1 // pred_fallthru
      _
    // Predicated region
    $region30: #{tpu_custom_call.1} parent=1 // pred_check
      _
    $region31: #{tpu_custom_call.1} parent=1 // pred_check_branch
      %65 = sbr.rel (0) target = $region33
    $region32: #{tpu_custom_call.1} parent=1 // pred_region
      _
    $region33: #{tpu_custom_call.1} parent=1 // pred_fallthru
      _
    // Predicated region
    $region34: #{tpu_custom_call.1} parent=1 // pred_check
      _
    $region35: #{tpu_custom_call.1} parent=1 // pred_check_branch
      %67 = sbr.rel (0) target = $region37
    $region36: #{tpu_custom_call.1} parent=1 // pred_region
      _
    $region37: #{tpu_custom_call.1} parent=1 // pred_fallthru
      _
    // Predicated region
    $region38: #{tpu_custom_call.1} parent=1 // pred_check
      _
    $region39: #{tpu_custom_call.1} parent=1 // pred_check_branch
      %69 = sbr.rel (0) target = $region41
    $region40: #{tpu_custom_call.1} parent=1 // pred_region
      _
    $region41: #{tpu_custom_call.1} parent=1 // pred_fallthru
      _
    // Predicated region
    $region42: #{tpu_custom_call.1} parent=1 // pred_check
      _
    $region43: #{tpu_custom_call.1} parent=1 // pred_check_branch
      %71 = sbr.rel (0) target = $region45
    $region44: #{tpu_custom_call.1} parent=1 // pred_region
      _
    $region45: #{tpu_custom_call.1} parent=1 // pred_fallthru
      _
    // Predicated region
    $region46: #{tpu_custom_call.1} parent=1 // pred_check
      _
    $region47: #{tpu_custom_call.1} parent=1 // pred_check_branch
      %73 = sbr.rel (0) target = $region49
    $region48: #{tpu_custom_call.1} parent=1 // pred_region
      %74 = dma.done [#allocation4], 1024
    $region49: #{tpu_custom_call.1} parent=1 // pred_fallthru
      _
    // Predicated region
    $region50: #{tpu_custom_call.1} parent=1 // pred_check
      _
    $region51: #{tpu_custom_call.1} parent=1 // pred_check_branch
      %76 = sbr.rel (0) target = $region53
    $region52: #{tpu_custom_call.1} parent=1 // pred_region
      %77 = dma.done [#allocation7], 512
    $region53: #{tpu_custom_call.1} parent=1 // pred_fallthru
      _
    // Predicated region
    $region54: #{tpu_custom_call.1} parent=1 // pred_check
      _
    $region55: #{tpu_custom_call.1} parent=1 // pred_check_branch
      %79 = sbr.rel (0) target = $region57
    $region56: #{tpu_custom_call.1} parent=1 // pred_region
      %80 = dma.done [#allocation7], 512
    $region57: #{tpu_custom_call.1} parent=1 // pred_fallthru
      _
    %v81 = vld [vmem:[#allocation6] sm:$0xff]
    %v82 = vld [vmem:[#allocation6 + $0x8] sm:$0xff]
    %v83 = vld [vmem:[#allocation6 + $0x10] sm:$0xff]
    %v84 = vld [vmem:[#allocation6 + $0x18] sm:$0xff]
    %v85 = vld [vmem:[%s0] sm:$0xff]
    %v86 = vld [vmem:[%s0 + $0x8] sm:$0xff]
    %v87 = vld [vmem:[%s0 + $0x10] sm:$0xff]
    %v88 = vld [vmem:[%s0 + $0x18] sm:$0xff]
    %v89 = vld [vmem:[%s0 + $0x20] sm:$0xff]
    %v90 = vld [vmem:[%s0 + $0x28] sm:$0xff]
    %v91 = vld [vmem:[%s0 + $0x30] sm:$0xff]
    %v92 = vld [vmem:[%s0 + $0x38] sm:$0xff]
    %v93 = vld [vmem:[%s0 + $0x40] sm:$0xff]
    %v94 = vld [vmem:[%s0 + $0x48] sm:$0xff]
    %v95 = vld [vmem:[%s0 + $0x50] sm:$0xff]
    %v96 = vld [vmem:[%s0 + $0x58] sm:$0xff]
    %v97 = vld [vmem:[%s0 + $0x60] sm:$0xff]
    %v98 = vld [vmem:[%s0 + $0x68] sm:$0xff]
    %v99 = vld [vmem:[%s0 + $0x70] sm:$0xff]
    %v100 = vld [vmem:[%s0 + $0x78] sm:$0xff]
    %v101 = vld [vmem:[%s7] sm:$0xff]
    %v102 = vld [vmem:[%s7 + $0x8] sm:$0xff]
    %v103 = vld [vmem:[%s7 + $0x10] sm:$0xff]
    %v104 = vld [vmem:[%s7 + $0x18] sm:$0xff]
    %106 = vset.pattern.permute.xlu0 0
    %107 = vperm.xlu0 %106, %v101
    %v108 = vpop.permute.xlu0 %107
    %111 = vset.pattern.permute.xlu0 0
    %112 = vperm.xlu0 %111, %v102
    %v113 = vpop.permute.xlu0 %112
    %116 = vset.pattern.permute.xlu0 0
    %117 = vperm.xlu0 %116, %v103
    %v118 = vpop.permute.xlu0 %117
    %121 = vset.pattern.permute.xlu0 0
    %122 = vperm.xlu0 %121, %v104
    %v123 = vpop.permute.xlu0 %122
    %vm125 = vcmask 261120
    %v127 = vsel %vm125, %v81, 0
    %v130 = vsel %vm125, %v82, 0
    %v133 = vsel %vm125, %v83, 0
    %v136 = vsel %vm125, %v84, 0
    %138 = vmatprep.subr.mxu0 %v86
    %139 = vmatpush1.msra.mxu0 %v85
    %140 = vmatprep.subr.mxu0 %v90
    %141 = vmatpush1.msra.mxu0 %v89
    %142 = vmatprep.subr.mxu0 %v94
    %143 = vmatpush1.msra.mxu0 %v93
    %144 = vmatprep.subr.mxu0 %v98
    %145 = vmatpush1.msra.mxu0 %v97
    %146 = vmatprep.subr.mxu0 0.0
    %147 = vmatpush1.msra.mxu0 0.0
    %148 = vmatprep.subr.mxu0 0.0
    %149 = vmatpush1.msra.mxu0 0.0
    %150 = vmatprep.subr.mxu0 0.0
    %151 = vmatpush1.msra.mxu0 0.0
    %152 = vmatprep.subr.mxu0 0.0
    %153 = vmatpush1.msra.mxu0 0.0
    %154 = vmatprep.subr.mxu0 0.0
    %155 = vmatpush1.msra.mxu0 0.0
    %156 = vmatprep.subr.mxu0 0.0
    %157 = vmatpush1.msra.mxu0 0.0
    %158 = vmatprep.subr.mxu0 0.0
    %159 = vmatpush1.msra.mxu0 0.0
    %160 = vmatprep.subr.mxu0 0.0
    %161 = vmatpush1.msra.mxu0 0.0
    %162 = vmatprep.subr.mxu0 0.0
    %163 = vmatpush1.msra.mxu0 0.0
    %164 = vmatprep.subr.mxu0 0.0
    %165 = vmatpush1.msra.mxu0 0.0
    %166 = vmatprep.subr.mxu0 0.0
    %167 = vmatpush1.msra.mxu0 0.0
    %168 = vmatprep.subr.mxu0 0.0
    %169 = vmatpush1.msra.mxu0 0.0
    %170 = vmatprep.subr.mxu0 0.0
    %171 = vmatpush1.msra.mxu0 0.0
    %172 = vmatprep.subr.mxu0 0.0
    %173 = vmatpush1.msra.mxu0 0.0
    %174 = vmatprep.subr.mxu0 0.0
    %175 = vmatpush1.msra.mxu0 0.0
    %176 = vmatprep.subr.mxu0 0.0
    %177 = vmatpush1.msra.mxu0 0.0
    %178 = vmatprep.subr.mxu0 0.0
    %179 = vmatpush1.msra.mxu0 0.0
    %180 = vmatprep.subr.mxu0 0.0
    %181 = vmatpush1.msra.mxu0 0.0
    %182 = vmatprep.subr.mxu0 0.0
    %183 = vmatpush1.msra.mxu0 0.0
    %184 = vmatprep.subr.mxu0 0.0
    %185 = vmatpush1.msra.mxu0 0.0
    %186 = vmatprep.subr.mxu0 0.0
    %187 = vmatpush1.msra.mxu0 0.0
    %188 = vmatprep.subr.mxu0 0.0
    %189 = vmatpush1.msra.mxu0 0.0
    %190 = vmatprep.subr.mxu0 0.0
    %191 = vmatpush1.msra.mxu0 0.0
    %192 = vmatprep.subr.mxu0 0.0
    %193 = vmatpush1.msra.mxu0 0.0
    %194 = vmatprep.subr.mxu0 0.0
    %195 = vmatpush1.msra.mxu0 0.0
    %196 = vmatprep.subr.mxu0 0.0
    %197 = vmatpush1.msra.mxu0 0.0
    %198 = vmatprep.subr.mxu0 0.0
    %199 = vmatpush1.msra.mxu0 0.0
    %200 = vmatprep.subr.mxu0 0.0
    %201 = vmatpush1.msra.mxu0 0.0
    %202 = vmatprep.mubr.f32.mxu0 0.0
    %203 = vmatmul.mubr.f32.gmra.mrb[0].mxu0 %v127
    %v204 = vpop.f32.mrb[0].mxu0
    %v205 = vadd.f32 %v108, %v204
    %v206 = vpop.f32.mrb[0].mxu0
    %v207 = vadd.f32 %v108, %v206
    %208 = vmatprep.mubr.f32.mxu0 0.0
    %209 = vmatmul.mubr.f32.gmra.mrb[0].mxu0 %v130
    %v210 = vpop.f32.mrb[0].mxu0
    %v211 = vadd.f32 %v113, %v210
    %v212 = vpop.f32.mrb[0].mxu0
    %v213 = vadd.f32 %v113, %v212
    %214 = vmatprep.mubr.f32.mxu0 0.0
    %215 = vmatmul.mubr.f32.gmra.mrb[0].mxu0 %v133
    %v216 = vpop.f32.mrb[0].mxu0
    %v217 = vadd.f32 %v118, %v216
    %v218 = vpop.f32.mrb[0].mxu0
    %v219 = vadd.f32 %v118, %v218
    %220 = vmatprep.mubr.f32.mxu0 0.0
    %221 = vmatmul.mubr.f32.gmra.mrb[0].mxu0 %v136
    %v222 = vpop.f32.mrb[0].mxu0
    %v223 = vadd.f32 %v123, %v222
    %v224 = vpop.f32.mrb[0].mxu0
    %v225 = vadd.f32 %v123, %v224
    %226 = vdwg.mxu0
    %227 = vmatprep.subr.mxu0 %v88
    %228 = vmatpush1.msra.mxu0 %v87
    %229 = vmatprep.subr.mxu0 %v92
    %230 = vmatpush1.msra.mxu0 %v91
    %231 = vmatprep.subr.mxu0 %v96
    %232 = vmatpush1.msra.mxu0 %v95
    %233 = vmatprep.subr.mxu0 %v100
    %234 = vmatpush1.msra.mxu0 %v99
    %235 = vmatprep.subr.mxu0 0.0
    %236 = vmatpush1.msra.mxu0 0.0
    %237 = vmatprep.subr.mxu0 0.0
    %238 = vmatpush1.msra.mxu0 0.0
    %239 = vmatprep.subr.mxu0 0.0
    %240 = vmatpush1.msra.mxu0 0.0
    %241 = vmatprep.subr.mxu0 0.0
    %242 = vmatpush1.msra.mxu0 0.0
    %243 = vmatprep.subr.mxu0 0.0
    %244 = vmatpush1.msra.mxu0 0.0
    %245 = vmatprep.subr.mxu0 0.0
    %246 = vmatpush1.msra.mxu0 0.0
    %247 = vmatprep.subr.mxu0 0.0
    %248 = vmatpush1.msra.mxu0 0.0
    %249 = vmatprep.subr.mxu0 0.0
    %250 = vmatpush1.msra.mxu0 0.0
    %251 = vmatprep.subr.mxu0 0.0
    %252 = vmatpush1.msra.mxu0 0.0
    %253 = vmatprep.subr.mxu0 0.0
    %254 = vmatpush1.msra.mxu0 0.0
    %255 = vmatprep.subr.mxu0 0.0
    %256 = vmatpush1.msra.mxu0 0.0
    %257 = vmatprep.subr.mxu0 0.0
    %258 = vmatpush1.msra.mxu0 0.0
    %259 = vmatprep.subr.mxu0 0.0
    %260 = vmatpush1.msra.mxu0 0.0
    %261 = vmatprep.subr.mxu0 0.0
    %262 = vmatpush1.msra.mxu0 0.0
    %263 = vmatprep.subr.mxu0 0.0
    %264 = vmatpush1.msra.mxu0 0.0
    %265 = vmatprep.subr.mxu0 0.0
    %266 = vmatpush1.msra.mxu0 0.0
    %267 = vmatprep.subr.mxu0 0.0
    %268 = vmatpush1.msra.mxu0 0.0
    %269 = vmatprep.subr.mxu0 0.0
    %270 = vmatpush1.msra.mxu0 0.0
    %271 = vmatprep.subr.mxu0 0.0
    %272 = vmatpush1.msra.mxu0 0.0
    %273 = vmatprep.subr.mxu0 0.0
    %274 = vmatpush1.msra.mxu0 0.0
    %275 = vmatprep.subr.mxu0 0.0
    %276 = vmatpush1.msra.mxu0 0.0
    %277 = vmatprep.subr.mxu0 0.0
    %278 = vmatpush1.msra.mxu0 0.0
    %279 = vmatprep.subr.mxu0 0.0
    %280 = vmatpush1.msra.mxu0 0.0
    %281 = vmatprep.subr.mxu0 0.0
    %282 = vmatpush1.msra.mxu0 0.0
    %283 = vmatprep.subr.mxu0 0.0
    %284 = vmatpush1.msra.mxu0 0.0
    %285 = vmatprep.subr.mxu0 0.0
    %286 = vmatpush1.msra.mxu0 0.0
    %287 = vmatprep.subr.mxu0 0.0
    %288 = vmatpush1.msra.mxu0 0.0
    %289 = vmatprep.subr.mxu0 0.0
    %290 = vmatpush1.msra.mxu0 0.0
    %291 = vmatprep.mubr.f32.mxu0 0.0
    %292 = vmatmul.mubr.f32.gmra.mrb[0].mxu0 %v127
    %v293 = vpop.f32.mrb[0].mxu0
    %v294 = vadd.f32 %v108, %v293
    %v295 = vpop.f32.mrb[0].mxu0
    %v296 = vadd.f32 %v108, %v295
    %297 = vmatprep.mubr.f32.mxu0 0.0
    %298 = vmatmul.mubr.f32.gmra.mrb[0].mxu0 %v130
    %v299 = vpop.f32.mrb[0].mxu0
    %v300 = vadd.f32 %v113, %v299
    %v301 = vpop.f32.mrb[0].mxu0
    %v302 = vadd.f32 %v113, %v301
    %303 = vmatprep.mubr.f32.mxu0 0.0
    %304 = vmatmul.mubr.f32.gmra.mrb[0].mxu0 %v133
    %v305 = vpop.f32.mrb[0].mxu0
    %v306 = vadd.f32 %v118, %v305
    %v307 = vpop.f32.mrb[0].mxu0
    %v308 = vadd.f32 %v118, %v307
    %309 = vmatprep.mubr.f32.mxu0 0.0
    %310 = vmatmul.mubr.f32.gmra.mrb[0].mxu0 %v136
    %v311 = vpop.f32.mrb[0].mxu0
    %v312 = vadd.f32 %v123, %v311
    %v313 = vpop.f32.mrb[0].mxu0
    %v314 = vadd.f32 %v123, %v313
    %315 = vdwg.mxu0
    %v316 = vld [vmem:[%s3] sm:$0xff]
    %v317 = vld [vmem:[%s3 + $0x8] sm:$0xff]
    %v318 = vld [vmem:[%s3 + $0x10] sm:$0xff]
    %v319 = vld [vmem:[%s3 + $0x18] sm:$0xff]
    %v320 = vld [vmem:[#allocation3] sm:$0xff]
    %v321 = vld [vmem:[#allocation3 + $0x8] sm:$0xff]
    %v322 = vld [vmem:[#allocation3 + $0x10] sm:$0xff]
    %v323 = vld [vmem:[#allocation3 + $0x18] sm:$0xff]
    %v324 = vld [vmem:[#allocation3 + $0x20] sm:$0x3f]
    %v325 = vld [vmem:[#allocation3 + $0x28] sm:$0x3f]
    %v326 = vld [vmem:[#allocation3 + $0x30] sm:$0x3f]
    %v327 = vld [vmem:[#allocation3 + $0x38] sm:$0x3f]
    %v328 = vld [vmem:[%s8] sm:$0xff]
    %v329 = vld [vmem:[%s8 + $0x8] sm:$0xff]
    %v330 = vld [vmem:[%s8 + $0x10] sm:$0xff]
    %v331 = vld [vmem:[%s8 + $0x18] sm:$0xff]
    %333 = vset.pattern.permute.xlu0 0
    %334 = vperm.xlu0 %333, %v328
    %v335 = vpop.permute.xlu0 %334
    %338 = vset.pattern.permute.xlu0 0
    %339 = vperm.xlu0 %338, %v329
    %v340 = vpop.permute.xlu0 %339
    %343 = vset.pattern.permute.xlu0 0
    %344 = vperm.xlu0 %343, %v330
    %v345 = vpop.permute.xlu0 %344
    %348 = vset.pattern.permute.xlu0 0
    %349 = vperm.xlu0 %348, %v331
    %v350 = vpop.permute.xlu0 %349
    %vm352 = vcmask 113664
    %v354 = vsel %vm352, %v316, 0
    %v357 = vsel %vm352, %v317, 0
    %v360 = vsel %vm352, %v318, 0
    %v363 = vsel %vm352, %v319, 0
    %vm365 = vcmask 1045504
    %v367 = vsel %vm365, %v324, 0
    %v370 = vsel %vm365, %v325, 0
    %v373 = vsel %vm365, %v326, 0
    %v376 = vsel %vm365, %v327, 0
    %378 = vmatprep.subr.mxu0 %v321
    %379 = vmatpush1.msra.mxu0 %v320
    %380 = vmatprep.subr.mxu0 %v370
    %381 = vmatpush1.msra.mxu0 %v367
    %382 = vmatprep.subr.mxu0 0.0
    %383 = vmatpush1.msra.mxu0 0.0
    %384 = vmatprep.subr.mxu0 0.0
    %385 = vmatpush1.msra.mxu0 0.0
    %386 = vmatprep.subr.mxu0 0.0
    %387 = vmatpush1.msra.mxu0 0.0
    %388 = vmatprep.subr.mxu0 0.0
    %389 = vmatpush1.msra.mxu0 0.0
    %390 = vmatprep.subr.mxu0 0.0
    %391 = vmatpush1.msra.mxu0 0.0
    %392 = vmatprep.subr.mxu0 0.0
    %393 = vmatpush1.msra.mxu0 0.0
    %394 = vmatprep.subr.mxu0 0.0
    %395 = vmatpush1.msra.mxu0 0.0
    %396 = vmatprep.subr.mxu0 0.0
    %397 = vmatpush1.msra.mxu0 0.0
    %398 = vmatprep.subr.mxu0 0.0
    %399 = vmatpush1.msra.mxu0 0.0
    %400 = vmatprep.subr.mxu0 0.0
    %401 = vmatpush1.msra.mxu0 0.0
    %402 = vmatprep.subr.mxu0 0.0
    %403 = vmatpush1.msra.mxu0 0.0
    %404 = vmatprep.subr.mxu0 0.0
    %405 = vmatpush1.msra.mxu0 0.0
    %406 = vmatprep.subr.mxu0 0.0
    %407 = vmatpush1.msra.mxu0 0.0
    %408 = vmatprep.subr.mxu0 0.0
    %409 = vmatpush1.msra.mxu0 0.0
    %410 = vmatprep.subr.mxu0 0.0
    %411 = vmatpush1.msra.mxu0 0.0
    %412 = vmatprep.subr.mxu0 0.0
    %413 = vmatpush1.msra.mxu0 0.0
    %414 = vmatprep.subr.mxu0 0.0
    %415 = vmatpush1.msra.mxu0 0.0
    %416 = vmatprep.subr.mxu0 0.0
    %417 = vmatpush1.msra.mxu0 0.0
    %418 = vmatprep.subr.mxu0 0.0
    %419 = vmatpush1.msra.mxu0 0.0
    %420 = vmatprep.subr.mxu0 0.0
    %421 = vmatpush1.msra.mxu0 0.0
    %422 = vmatprep.subr.mxu0 0.0
    %423 = vmatpush1.msra.mxu0 0.0
    %424 = vmatprep.subr.mxu0 0.0
    %425 = vmatpush1.msra.mxu0 0.0
    %426 = vmatprep.subr.mxu0 0.0
    %427 = vmatpush1.msra.mxu0 0.0
    %428 = vmatprep.subr.mxu0 0.0
    %429 = vmatpush1.msra.mxu0 0.0
    %430 = vmatprep.subr.mxu0 0.0
    %431 = vmatpush1.msra.mxu0 0.0
    %432 = vmatprep.subr.mxu0 0.0
    %433 = vmatpush1.msra.mxu0 0.0
    %434 = vmatprep.subr.mxu0 0.0
    %435 = vmatpush1.msra.mxu0 0.0
    %436 = vmatprep.subr.mxu0 0.0
    %437 = vmatpush1.msra.mxu0 0.0
    %438 = vmatprep.subr.mxu0 0.0
    %439 = vmatpush1.msra.mxu0 0.0
    %440 = vmatprep.subr.mxu0 0.0
    %441 = vmatpush1.msra.mxu0 0.0
    %442 = vmatprep.mubr.f32.mxu0 0.0
    %443 = vmatmul.mubr.f32.gmra.mrb[0].mxu0 %v354
    %v444 = vpop.f32.mrb[0].mxu0
    %v445 = vadd.f32 %v335, %v444
    %v446 = vpop.f32.mrb[0].mxu0
    %v447 = vadd.f32 %v335, %v446
    %448 = vmatprep.mubr.f32.mxu0 0.0
    %449 = vmatmul.mubr.f32.gmra.mrb[0].mxu0 %v357
    %v450 = vpop.f32.mrb[0].mxu0
    %v451 = vadd.f32 %v340, %v450
    %v452 = vpop.f32.mrb[0].mxu0
    %v453 = vadd.f32 %v340, %v452
    %454 = vmatprep.mubr.f32.mxu0 0.0
    %455 = vmatmul.mubr.f32.gmra.mrb[0].mxu0 %v360
    %v456 = vpop.f32.mrb[0].mxu0
    %v457 = vadd.f32 %v345, %v456
    %v458 = vpop.f32.mrb[0].mxu0
    %v459 = vadd.f32 %v345, %v458
    %460 = vmatprep.mubr.f32.mxu0 0.0
    %461 = vmatmul.mubr.f32.gmra.mrb[0].mxu0 %v363
    %v462 = vpop.f32.mrb[0].mxu0
    %v463 = vadd.f32 %v350, %v462
    %v464 = vpop.f32.mrb[0].mxu0
    %v465 = vadd.f32 %v350, %v464
    %466 = vdwg.mxu0
    %467 = vmatprep.subr.mxu0 %v323
    %468 = vmatpush1.msra.mxu0 %v322
    %469 = vmatprep.subr.mxu0 %v376
    %470 = vmatpush1.msra.mxu0 %v373
    %471 = vmatprep.subr.mxu0 0.0
    %472 = vmatpush1.msra.mxu0 0.0
    %473 = vmatprep.subr.mxu0 0.0
    %474 = vmatpush1.msra.mxu0 0.0
    %475 = vmatprep.subr.mxu0 0.0
    %476 = vmatpush1.msra.mxu0 0.0
    %477 = vmatprep.subr.mxu0 0.0
    %478 = vmatpush1.msra.mxu0 0.0
    %479 = vmatprep.subr.mxu0 0.0
    %480 = vmatpush1.msra.mxu0 0.0
    %481 = vmatprep.subr.mxu0 0.0
    %482 = vmatpush1.msra.mxu0 0.0
    %483 = vmatprep.subr.mxu0 0.0
    %484 = vmatpush1.msra.mxu0 0.0
    %485 = vmatprep.subr.mxu0 0.0
    %486 = vmatpush1.msra.mxu0 0.0
    %487 = vmatprep.subr.mxu0 0.0
    %488 = vmatpush1.msra.mxu0 0.0
    %489 = vmatprep.subr.mxu0 0.0
    %490 = vmatpush1.msra.mxu0 0.0
    %491 = vmatprep.subr.mxu0 0.0
    %492 = vmatpush1.msra.mxu0 0.0
    %493 = vmatprep.subr.mxu0 0.0
    %494 = vmatpush1.msra.mxu0 0.0
    %495 = vmatprep.subr.mxu0 0.0
    %496 = vmatpush1.msra.mxu0 0.0
    %497 = vmatprep.subr.mxu0 0.0
    %498 = vmatpush1.msra.mxu0 0.0
    %499 = vmatprep.subr.mxu0 0.0
    %500 = vmatpush1.msra.mxu0 0.0
    %501 = vmatprep.subr.mxu0 0.0
    %502 = vmatpush1.msra.mxu0 0.0
    %503 = vmatprep.subr.mxu0 0.0
    %504 = vmatpush1.msra.mxu0 0.0
    %505 = vmatprep.subr.mxu0 0.0
    %506 = vmatpush1.msra.mxu0 0.0
    %507 = vmatprep.subr.mxu0 0.0
    %508 = vmatpush1.msra.mxu0 0.0
    %509 = vmatprep.subr.mxu0 0.0
    %510 = vmatpush1.msra.mxu0 0.0
    %511 = vmatprep.subr.mxu0 0.0
    %512 = vmatpush1.msra.mxu0 0.0
    %513 = vmatprep.subr.mxu0 0.0
    %514 = vmatpush1.msra.mxu0 0.0
    %515 = vmatprep.subr.mxu0 0.0
    %516 = vmatpush1.msra.mxu0 0.0
    %517 = vmatprep.subr.mxu0 0.0
    %518 = vmatpush1.msra.mxu0 0.0
    %519 = vmatprep.subr.mxu0 0.0
    %520 = vmatpush1.msra.mxu0 0.0
    %521 = vmatprep.subr.mxu0 0.0
    %522 = vmatpush1.msra.mxu0 0.0
    %523 = vmatprep.subr.mxu0 0.0
    %524 = vmatpush1.msra.mxu0 0.0
    %525 = vmatprep.subr.mxu0 0.0
    %526 = vmatpush1.msra.mxu0 0.0
    %527 = vmatprep.subr.mxu0 0.0
    %528 = vmatpush1.msra.mxu0 0.0
    %529 = vmatprep.subr.mxu0 0.0
    %530 = vmatpush1.msra.mxu0 0.0
    %531 = vmatprep.mubr.f32.mxu0 0.0
    %532 = vmatmul.mubr.f32.gmra.mrb[0].mxu0 %v354
    %v533 = vpop.f32.mrb[0].mxu0
    %v534 = vadd.f32 %v335, %v533
    %v535 = vpop.f32.mrb[0].mxu0
    %v536 = vadd.f32 %v335, %v535
    %537 = vmatprep.mubr.f32.mxu0 0.0
    %538 = vmatmul.mubr.f32.gmra.mrb[0].mxu0 %v357
    %v539 = vpop.f32.mrb[0].mxu0
    %v540 = vadd.f32 %v340, %v539
    %v541 = vpop.f32.mrb[0].mxu0
    %v542 = vadd.f32 %v340, %v541
    %543 = vmatprep.mubr.f32.mxu0 0.0
    %544 = vmatmul.mubr.f32.gmra.mrb[0].mxu0 %v360
    %v545 = vpop.f32.mrb[0].mxu0
    %v546 = vadd.f32 %v345, %v545
    %v547 = vpop.f32.mrb[0].mxu0
    %v548 = vadd.f32 %v345, %v547
    %549 = vmatprep.mubr.f32.mxu0 0.0
    %550 = vmatmul.mubr.f32.gmra.mrb[0].mxu0 %v363
    %v551 = vpop.f32.mrb[0].mxu0
    %v552 = vadd.f32 %v350, %v551
    %v553 = vpop.f32.mrb[0].mxu0
    %v554 = vadd.f32 %v350, %v553
    %555 = vdwg.mxu0
    %v556 = vmax.f32 %v205, 0.0
    %v557 = vmax.f32 %v207, 0.0
    %v558 = vmax.f32 %v294, 0.0
    %v559 = vmax.f32 %v296, 0.0
    %v560 = vmax.f32 %v211, 0.0
    %v561 = vmax.f32 %v213, 0.0
    %v562 = vmax.f32 %v300, 0.0
    %v563 = vmax.f32 %v302, 0.0
    %v564 = vmax.f32 %v217, 0.0
    %v565 = vmax.f32 %v219, 0.0
    %v566 = vmax.f32 %v306, 0.0
    %v567 = vmax.f32 %v308, 0.0
    %v568 = vmax.f32 %v223, 0.0
    %v569 = vmax.f32 %v225, 0.0
    %v570 = vmax.f32 %v312, 0.0
    %v571 = vmax.f32 %v314, 0.0
    %v572 = vmax.f32 %v445, 0.0
    %v573 = vmax.f32 %v447, 0.0
    %v574 = vmax.f32 %v534, 0.0
    %v575 = vmax.f32 %v536, 0.0
    %v576 = vmax.f32 %v451, 0.0
    %v577 = vmax.f32 %v453, 0.0
    %v578 = vmax.f32 %v540, 0.0
    %v579 = vmax.f32 %v542, 0.0
    %v580 = vmax.f32 %v457, 0.0
    %v581 = vmax.f32 %v459, 0.0
    %v582 = vmax.f32 %v546, 0.0
    %v583 = vmax.f32 %v548, 0.0
    %v584 = vmax.f32 %v463, 0.0
    %v585 = vmax.f32 %v465, 0.0
    %v586 = vmax.f32 %v552, 0.0
    %v587 = vmax.f32 %v554, 0.0
    %v588 = vld [vmem:[%s4] sm:$0xff]
    %v589 = vld [vmem:[%s4 + $0x8] sm:$0xff]
    %v590 = vld [vmem:[%s4 + $0x10] sm:$0xff]
    %v591 = vld [vmem:[%s4 + $0x18] sm:$0xff]
    %v592 = vld [vmem:[#allocation8] sm:$0xff]
    %v593 = vld [vmem:[#allocation8 + $0x8] sm:$0xff]
    %v594 = vld [vmem:[#allocation8 + $0x10] sm:$0xff]
    %v595 = vld [vmem:[#allocation8 + $0x18] sm:$0xff]
    %v597 = vsel %vm125, %v592, 0
    %v600 = vsel %vm125, %v593, 0
    %v603 = vsel %vm125, %v594, 0
    %v606 = vsel %vm125, %v595, 0
    %608 = vmatprep.subr.mxu0 %v573
    %609 = vmatpush1.msra.mxu0 %v572
    %610 = vmatprep.subr.mxu0 %v577
    %611 = vmatpush1.msra.mxu0 %v576
    %612 = vmatprep.subr.mxu0 %v581
    %613 = vmatpush1.msra.mxu0 %v580
    %614 = vmatprep.subr.mxu0 %v585
    %615 = vmatpush1.msra.mxu0 %v584
    %616 = vmatprep.subr.mxu0 0.0
    %617 = vmatpush1.msra.mxu0 0.0
    %618 = vmatprep.subr.mxu0 0.0
    %619 = vmatpush1.msra.mxu0 0.0
    %620 = vmatprep.subr.mxu0 0.0
    %621 = vmatpush1.msra.mxu0 0.0
    %622 = vmatprep.subr.mxu0 0.0
    %623 = vmatpush1.msra.mxu0 0.0
    %624 = vmatprep.subr.mxu0 0.0
    %625 = vmatpush1.msra.mxu0 0.0
    %626 = vmatprep.subr.mxu0 0.0
    %627 = vmatpush1.msra.mxu0 0.0
    %628 = vmatprep.subr.mxu0 0.0
    %629 = vmatpush1.msra.mxu0 0.0
    %630 = vmatprep.subr.mxu0 0.0
    %631 = vmatpush1.msra.mxu0 0.0
    %632 = vmatprep.subr.mxu0 0.0
    %633 = vmatpush1.msra.mxu0 0.0
    %634 = vmatprep.subr.mxu0 0.0
    %635 = vmatpush1.msra.mxu0 0.0
    %636 = vmatprep.subr.mxu0 0.0
    %637 = vmatpush1.msra.mxu0 0.0
    %638 = vmatprep.subr.mxu0 0.0
    %639 = vmatpush1.msra.mxu0 0.0
    %640 = vmatprep.subr.mxu0 0.0
    %641 = vmatpush1.msra.mxu0 0.0
    %642 = vmatprep.subr.mxu0 0.0
    %643 = vmatpush1.msra.mxu0 0.0
    %644 = vmatprep.subr.mxu0 0.0
    %645 = vmatpush1.msra.mxu0 0.0
    %646 = vmatprep.subr.mxu0 0.0
    %647 = vmatpush1.msra.mxu0 0.0
    %648 = vmatprep.subr.mxu0 0.0
    %649 = vmatpush1.msra.mxu0 0.0
    %650 = vmatprep.subr.mxu0 0.0
    %651 = vmatpush1.msra.mxu0 0.0
    %652 = vmatprep.subr.mxu0 0.0
    %653 = vmatpush1.msra.mxu0 0.0
    %654 = vmatprep.subr.mxu0 0.0
    %655 = vmatpush1.msra.mxu0 0.0
    %656 = vmatprep.subr.mxu0 0.0
    %657 = vmatpush1.msra.mxu0 0.0
    %658 = vmatprep.subr.mxu0 0.0
    %659 = vmatpush1.msra.mxu0 0.0
    %660 = vmatprep.subr.mxu0 0.0
    %661 = vmatpush1.msra.mxu0 0.0
    %662 = vmatprep.subr.mxu0 0.0
    %663 = vmatpush1.msra.mxu0 0.0
    %664 = vmatprep.subr.mxu0 0.0
    %665 = vmatpush1.msra.mxu0 0.0
    %666 = vmatprep.subr.mxu0 0.0
    %667 = vmatpush1.msra.mxu0 0.0
    %668 = vmatprep.subr.mxu0 0.0
    %669 = vmatpush1.msra.mxu0 0.0
    %670 = vmatprep.subr.mxu0 0.0
    %671 = vmatpush1.msra.mxu0 0.0
    %672 = vmatprep.mubr.f32.mxu0 0.0
    %673 = vmatmul.mubr.f32.gmra.mrb[0].mxu0 %v597
    %v674 = vpop.f32.mrb[0].mxu0
    %v675 = vadd.f32 0.0, %v674
    %v676 = vpop.f32.mrb[0].mxu0
    %v677 = vadd.f32 0.0, %v676
    %678 = vmatprep.mubr.f32.mxu0 0.0
    %679 = vmatmul.mubr.f32.gmra.mrb[0].mxu0 %v600
    %v680 = vpop.f32.mrb[0].mxu0
    %v681 = vadd.f32 0.0, %v680
    %v682 = vpop.f32.mrb[0].mxu0
    %v683 = vadd.f32 0.0, %v682
    %684 = vmatprep.mubr.f32.mxu0 0.0
    %685 = vmatmul.mubr.f32.gmra.mrb[0].mxu0 %v603
    %v686 = vpop.f32.mrb[0].mxu0
    %v687 = vadd.f32 0.0, %v686
    %v688 = vpop.f32.mrb[0].mxu0
    %v689 = vadd.f32 0.0, %v688
    %690 = vmatprep.mubr.f32.mxu0 0.0
    %691 = vmatmul.mubr.f32.gmra.mrb[0].mxu0 %v606
    %v692 = vpop.f32.mrb[0].mxu0
    %v693 = vadd.f32 0.0, %v692
    %v694 = vpop.f32.mrb[0].mxu0
    %v695 = vadd.f32 0.0, %v694
    %696 = vdwg.mxu0
    %697 = vmatprep.subr.mxu0 %v575
    %698 = vmatpush1.msra.mxu0 %v574
    %699 = vmatprep.subr.mxu0 %v579
    %700 = vmatpush1.msra.mxu0 %v578
    %701 = vmatprep.subr.mxu0 %v583
    %702 = vmatpush1.msra.mxu0 %v582
    %703 = vmatprep.subr.mxu0 %v587
    %704 = vmatpush1.msra.mxu0 %v586
    %705 = vmatprep.subr.mxu0 0.0
    %706 = vmatpush1.msra.mxu0 0.0
    %707 = vmatprep.subr.mxu0 0.0
    %708 = vmatpush1.msra.mxu0 0.0
    %709 = vmatprep.subr.mxu0 0.0
    %710 = vmatpush1.msra.mxu0 0.0
    %711 = vmatprep.subr.mxu0 0.0
    %712 = vmatpush1.msra.mxu0 0.0
    %713 = vmatprep.subr.mxu0 0.0
    %714 = vmatpush1.msra.mxu0 0.0
    %715 = vmatprep.subr.mxu0 0.0
    %716 = vmatpush1.msra.mxu0 0.0
    %717 = vmatprep.subr.mxu0 0.0
    %718 = vmatpush1.msra.mxu0 0.0
    %719 = vmatprep.subr.mxu0 0.0
    %720 = vmatpush1.msra.mxu0 0.0
    %721 = vmatprep.subr.mxu0 0.0
    %722 = vmatpush1.msra.mxu0 0.0
    %723 = vmatprep.subr.mxu0 0.0
    %724 = vmatpush1.msra.mxu0 0.0
    %725 = vmatprep.subr.mxu0 0.0
    %726 = vmatpush1.msra.mxu0 0.0
    %727 = vmatprep.subr.mxu0 0.0
    %728 = vmatpush1.msra.mxu0 0.0
    %729 = vmatprep.subr.mxu0 0.0
    %730 = vmatpush1.msra.mxu0 0.0
    %731 = vmatprep.subr.mxu0 0.0
    %732 = vmatpush1.msra.mxu0 0.0
    %733 = vmatprep.subr.mxu0 0.0
    %734 = vmatpush1.msra.mxu0 0.0
    %735 = vmatprep.subr.mxu0 0.0
    %736 = vmatpush1.msra.mxu0 0.0
    %737 = vmatprep.subr.mxu0 0.0
    %738 = vmatpush1.msra.mxu0 0.0
    %739 = vmatprep.subr.mxu0 0.0
    %740 = vmatpush1.msra.mxu0 0.0
    %741 = vmatprep.subr.mxu0 0.0
    %742 = vmatpush1.msra.mxu0 0.0
    %743 = vmatprep.subr.mxu0 0.0
    %744 = vmatpush1.msra.mxu0 0.0
    %745 = vmatprep.subr.mxu0 0.0
    %746 = vmatpush1.msra.mxu0 0.0
    %747 = vmatprep.subr.mxu0 0.0
    %748 = vmatpush1.msra.mxu0 0.0
    %749 = vmatprep.subr.mxu0 0.0
    %750 = vmatpush1.msra.mxu0 0.0
    %751 = vmatprep.subr.mxu0 0.0
    %752 = vmatpush1.msra.mxu0 0.0
    %753 = vmatprep.subr.mxu0 0.0
    %754 = vmatpush1.msra.mxu0 0.0
    %755 = vmatprep.subr.mxu0 0.0
    %756 = vmatpush1.msra.mxu0 0.0
    %757 = vmatprep.subr.mxu0 0.0
    %758 = vmatpush1.msra.mxu0 0.0
    %759 = vmatprep.subr.mxu0 0.0
    %760 = vmatpush1.msra.mxu0 0.0
    %761 = vmatprep.mubr.f32.mxu0 0.0
    %762 = vmatmul.mubr.f32.gmra.mrb[0].mxu0 %v597
    %v763 = vpop.f32.mrb[0].mxu0
    %v764 = vadd.f32 0.0, %v763
    %v765 = vpop.f32.mrb[0].mxu0
    %v766 = vadd.f32 0.0, %v765
    %767 = vmatprep.mubr.f32.mxu0 0.0
    %768 = vmatmul.mubr.f32.gmra.mrb[0].mxu0 %v600
    %v769 = vpop.f32.mrb[0].mxu0
    %v770 = vadd.f32 0.0, %v769
    %v771 = vpop.f32.mrb[0].mxu0
    %v772 = vadd.f32 0.0, %v771
    %773 = vmatprep.mubr.f32.mxu0 0.0
    %774 = vmatmul.mubr.f32.gmra.mrb[0].mxu0 %v603
    %v775 = vpop.f32.mrb[0].mxu0
    %v776 = vadd.f32 0.0, %v775
    %v777 = vpop.f32.mrb[0].mxu0
    %v778 = vadd.f32 0.0, %v777
    %779 = vmatprep.mubr.f32.mxu0 0.0
    %780 = vmatmul.mubr.f32.gmra.mrb[0].mxu0 %v606
    %v781 = vpop.f32.mrb[0].mxu0
    %v782 = vadd.f32 0.0, %v781
    %v783 = vpop.f32.mrb[0].mxu0
    %v784 = vadd.f32 0.0, %v783
    %785 = vdwg.mxu0
    %v787 = vsel %vm125, %v588, 0
    %v790 = vsel %vm125, %v589, 0
    %v793 = vsel %vm125, %v590, 0
    %v796 = vsel %vm125, %v591, 0
    %798 = vmatprep.subr.mxu0 %v557
    %799 = vmatpush1.msra.mxu0 %v556
    %800 = vmatprep.subr.mxu0 %v561
    %801 = vmatpush1.msra.mxu0 %v560
    %802 = vmatprep.subr.mxu0 %v565
    %803 = vmatpush1.msra.mxu0 %v564
    %804 = vmatprep.subr.mxu0 %v569
    %805 = vmatpush1.msra.mxu0 %v568
    %806 = vmatprep.subr.mxu0 0.0
    %807 = vmatpush1.msra.mxu0 0.0
    %808 = vmatprep.subr.mxu0 0.0
    %809 = vmatpush1.msra.mxu0 0.0
    %810 = vmatprep.subr.mxu0 0.0
    %811 = vmatpush1.msra.mxu0 0.0
    %812 = vmatprep.subr.mxu0 0.0
    %813 = vmatpush1.msra.mxu0 0.0
    %814 = vmatprep.subr.mxu0 0.0
    %815 = vmatpush1.msra.mxu0 0.0
    %816 = vmatprep.subr.mxu0 0.0
    %817 = vmatpush1.msra.mxu0 0.0
    %818 = vmatprep.subr.mxu0 0.0
    %819 = vmatpush1.msra.mxu0 0.0
    %820 = vmatprep.subr.mxu0 0.0
    %821 = vmatpush1.msra.mxu0 0.0
    %822 = vmatprep.subr.mxu0 0.0
    %823 = vmatpush1.msra.mxu0 0.0
    %824 = vmatprep.subr.mxu0 0.0
    %825 = vmatpush1.msra.mxu0 0.0
    %826 = vmatprep.subr.mxu0 0.0
    %827 = vmatpush1.msra.mxu0 0.0
    %828 = vmatprep.subr.mxu0 0.0
    %829 = vmatpush1.msra.mxu0 0.0
    %830 = vmatprep.subr.mxu0 0.0
    %831 = vmatpush1.msra.mxu0 0.0
    %832 = vmatprep.subr.mxu0 0.0
    %833 = vmatpush1.msra.mxu0 0.0
    %834 = vmatprep.subr.mxu0 0.0
    %835 = vmatpush1.msra.mxu0 0.0
    %836 = vmatprep.subr.mxu0 0.0
    %837 = vmatpush1.msra.mxu0 0.0
    %838 = vmatprep.subr.mxu0 0.0
    %839 = vmatpush1.msra.mxu0 0.0
    %840 = vmatprep.subr.mxu0 0.0
    %841 = vmatpush1.msra.mxu0 0.0
    %842 = vmatprep.subr.mxu0 0.0
    %843 = vmatpush1.msra.mxu0 0.0
    %844 = vmatprep.subr.mxu0 0.0
    %845 = vmatpush1.msra.mxu0 0.0
    %846 = vmatprep.subr.mxu0 0.0
    %847 = vmatpush1.msra.mxu0 0.0
    %848 = vmatprep.subr.mxu0 0.0
    %849 = vmatpush1.msra.mxu0 0.0
    %850 = vmatprep.subr.mxu0 0.0
    %851 = vmatpush1.msra.mxu0 0.0
    %852 = vmatprep.subr.mxu0 0.0
    %853 = vmatpush1.msra.mxu0 0.0
    %854 = vmatprep.subr.mxu0 0.0
    %855 = vmatpush1.msra.mxu0 0.0
    %856 = vmatprep.subr.mxu0 0.0
    %857 = vmatpush1.msra.mxu0 0.0
    %858 = vmatprep.subr.mxu0 0.0
    %859 = vmatpush1.msra.mxu0 0.0
    %860 = vmatprep.subr.mxu0 0.0
    %861 = vmatpush1.msra.mxu0 0.0
    %862 = vmatprep.mubr.f32.mxu0 0.0
    %863 = vmatmul.mubr.f32.gmra.mrb[0].mxu0 %v787
    %v864 = vpop.f32.mrb[0].mxu0
    %v865 = vadd.f32 %v675, %v864
    %v866 = vpop.f32.mrb[0].mxu0
    %v867 = vadd.f32 %v677, %v866
    %868 = vmatprep.mubr.f32.mxu0 0.0
    %869 = vmatmul.mubr.f32.gmra.mrb[0].mxu0 %v790
    %v870 = vpop.f32.mrb[0].mxu0
    %v871 = vadd.f32 %v681, %v870
    %v872 = vpop.f32.mrb[0].mxu0
    %v873 = vadd.f32 %v683, %v872
    %874 = vmatprep.mubr.f32.mxu0 0.0
    %875 = vmatmul.mubr.f32.gmra.mrb[0].mxu0 %v793
    %v876 = vpop.f32.mrb[0].mxu0
    %v877 = vadd.f32 %v687, %v876
    %v878 = vpop.f32.mrb[0].mxu0
    %v879 = vadd.f32 %v689, %v878
    %880 = vmatprep.mubr.f32.mxu0 0.0
    %881 = vmatmul.mubr.f32.gmra.mrb[0].mxu0 %v796
    %v882 = vpop.f32.mrb[0].mxu0
    %v883 = vadd.f32 %v693, %v882
    %v884 = vpop.f32.mrb[0].mxu0
    %v885 = vadd.f32 %v695, %v884
    %886 = vdwg.mxu0
    %887 = vmatprep.subr.mxu0 %v559
    %888 = vmatpush1.msra.mxu0 %v558
    %889 = vmatprep.subr.mxu0 %v563
    %890 = vmatpush1.msra.mxu0 %v562
    %891 = vmatprep.subr.mxu0 %v567
    %892 = vmatpush1.msra.mxu0 %v566
    %893 = vmatprep.subr.mxu0 %v571
    %894 = vmatpush1.msra.mxu0 %v570
    %895 = vmatprep.subr.mxu0 0.0
    %896 = vmatpush1.msra.mxu0 0.0
    %897 = vmatprep.subr.mxu0 0.0
    %898 = vmatpush1.msra.mxu0 0.0
    %899 = vmatprep.subr.mxu0 0.0
    %900 = vmatpush1.msra.mxu0 0.0
    %901 = vmatprep.subr.mxu0 0.0
    %902 = vmatpush1.msra.mxu0 0.0
    %903 = vmatprep.subr.mxu0 0.0
    %904 = vmatpush1.msra.mxu0 0.0
    %905 = vmatprep.subr.mxu0 0.0
    %906 = vmatpush1.msra.mxu0 0.0
    %907 = vmatprep.subr.mxu0 0.0
    %908 = vmatpush1.msra.mxu0 0.0
    %909 = vmatprep.subr.mxu0 0.0
    %910 = vmatpush1.msra.mxu0 0.0
    %911 = vmatprep.subr.mxu0 0.0
    %912 = vmatpush1.msra.mxu0 0.0
    %913 = vmatprep.subr.mxu0 0.0
    %914 = vmatpush1.msra.mxu0 0.0
    %915 = vmatprep.subr.mxu0 0.0
    %916 = vmatpush1.msra.mxu0 0.0
    %917 = vmatprep.subr.mxu0 0.0
    %918 = vmatpush1.msra.mxu0 0.0
    %919 = vmatprep.subr.mxu0 0.0
    %920 = vmatpush1.msra.mxu0 0.0
    %921 = vmatprep.subr.mxu0 0.0
    %922 = vmatpush1.msra.mxu0 0.0
    %923 = vmatprep.subr.mxu0 0.0
    %924 = vmatpush1.msra.mxu0 0.0
    %925 = vmatprep.subr.mxu0 0.0
    %926 = vmatpush1.msra.mxu0 0.0
    %927 = vmatprep.subr.mxu0 0.0
    %928 = vmatpush1.msra.mxu0 0.0
    %929 = vmatprep.subr.mxu0 0.0
    %930 = vmatpush1.msra.mxu0 0.0
    %931 = vmatprep.subr.mxu0 0.0
    %932 = vmatpush1.msra.mxu0 0.0
    %933 = vmatprep.subr.mxu0 0.0
    %934 = vmatpush1.msra.mxu0 0.0
    %935 = vmatprep.subr.mxu0 0.0
    %936 = vmatpush1.msra.mxu0 0.0
    %937 = vmatprep.subr.mxu0 0.0
    %938 = vmatpush1.msra.mxu0 0.0
    %939 = vmatprep.subr.mxu0 0.0
    %940 = vmatpush1.msra.mxu0 0.0
    %941 = vmatprep.subr.mxu0 0.0
    %942 = vmatpush1.msra.mxu0 0.0
    %943 = vmatprep.subr.mxu0 0.0
    %944 = vmatpush1.msra.mxu0 0.0
    %945 = vmatprep.subr.mxu0 0.0
    %946 = vmatpush1.msra.mxu0 0.0
    %947 = vmatprep.subr.mxu0 0.0
    %948 = vmatpush1.msra.mxu0 0.0
    %949 = vmatprep.subr.mxu0 0.0
    %950 = vmatpush1.msra.mxu0 0.0
    %951 = vmatprep.mubr.f32.mxu0 0.0
    %952 = vmatmul.mubr.f32.gmra.mrb[0].mxu0 %v787
    %v953 = vpop.f32.mrb[0].mxu0
    %v954 = vadd.f32 %v764, %v953
    %v955 = vpop.f32.mrb[0].mxu0
    %v956 = vadd.f32 %v766, %v955
    %957 = vmatprep.mubr.f32.mxu0 0.0
    %958 = vmatmul.mubr.f32.gmra.mrb[0].mxu0 %v790
    %v959 = vpop.f32.mrb[0].mxu0
    %v960 = vadd.f32 %v770, %v959
    %v961 = vpop.f32.mrb[0].mxu0
    %v962 = vadd.f32 %v772, %v961
    %963 = vmatprep.mubr.f32.mxu0 0.0
    %964 = vmatmul.mubr.f32.gmra.mrb[0].mxu0 %v793
    %v965 = vpop.f32.mrb[0].mxu0
    %v966 = vadd.f32 %v776, %v965
    %v967 = vpop.f32.mrb[0].mxu0
    %v968 = vadd.f32 %v778, %v967
    %969 = vmatprep.mubr.f32.mxu0 0.0
    %970 = vmatmul.mubr.f32.gmra.mrb[0].mxu0 %v796
    %v971 = vpop.f32.mrb[0].mxu0
    %v972 = vadd.f32 %v782, %v971
    %v973 = vpop.f32.mrb[0].mxu0
    %v974 = vadd.f32 %v784, %v973
    %975 = vdwg.mxu0
    %v976 = vld [vmem:[%s9] sm:$0xff]
    %v977 = vld [vmem:[%s9 + $0x8] sm:$0xff]
    %v978 = vld [vmem:[%s9 + $0x10] sm:$0xff]
    %v979 = vld [vmem:[%s9 + $0x18] sm:$0xff]
    %981 = vset.pattern.permute.xlu0 0
    %982 = vperm.xlu0 %981, %v976
    %v983 = vpop.permute.xlu0 %982
    %986 = vset.pattern.permute.xlu0 0
    %987 = vperm.xlu0 %986, %v977
    %v988 = vpop.permute.xlu0 %987
    %991 = vset.pattern.permute.xlu0 0
    %992 = vperm.xlu0 %991, %v978
    %v993 = vpop.permute.xlu0 %992
    %996 = vset.pattern.permute.xlu0 0
    %997 = vperm.xlu0 %996, %v979
    %v998 = vpop.permute.xlu0 %997
    %v1000 = vadd.f32 %v865, %v983
    %v1001 = vadd.f32 %v867, %v983
    %v1002 = vadd.f32 %v954, %v983
    %v1003 = vadd.f32 %v956, %v983
    %v1004 = vadd.f32 %v871, %v988
    %v1005 = vadd.f32 %v873, %v988
    %v1006 = vadd.f32 %v960, %v988
    %v1007 = vadd.f32 %v962, %v988
    %v1008 = vadd.f32 %v877, %v993
    %v1009 = vadd.f32 %v879, %v993
    %v1010 = vadd.f32 %v966, %v993
    %v1011 = vadd.f32 %v968, %v993
    %v1012 = vadd.f32 %v883, %v998
    %v1013 = vadd.f32 %v885, %v998
    %v1014 = vadd.f32 %v972, %v998
    %v1015 = vadd.f32 %v974, %v998
    %v1016 = vmax.f32 %v1000, 0.0
    %v1017 = vmax.f32 %v1001, 0.0
    %v1018 = vmax.f32 %v1002, 0.0
    %v1019 = vmax.f32 %v1003, 0.0
    %v1020 = vmax.f32 %v1004, 0.0
    %v1021 = vmax.f32 %v1005, 0.0
    %v1022 = vmax.f32 %v1006, 0.0
    %v1023 = vmax.f32 %v1007, 0.0
    %v1024 = vmax.f32 %v1008, 0.0
    %v1025 = vmax.f32 %v1009, 0.0
    %v1026 = vmax.f32 %v1010, 0.0
    %v1027 = vmax.f32 %v1011, 0.0
    %v1028 = vmax.f32 %v1012, 0.0
    %v1029 = vmax.f32 %v1013, 0.0
    %v1030 = vmax.f32 %v1014, 0.0
    %v1031 = vmax.f32 %v1015, 0.0
    %v1032 = vld [vmem:[%s6] sm:$0x1]
    %s1033 = sld [smem:[#allocation2]]
    %v1034 = vstv %s1033
    %v1036 = vsel %vm125, %v1032, 0
    %1038 = vmatprep.subr.mxu0 %v1017
    %1039 = vmatpush1.msra.mxu0 %v1016
    %1040 = vmatprep.subr.mxu0 %v1021
    %1041 = vmatpush1.msra.mxu0 %v1020
    %1042 = vmatprep.subr.mxu0 %v1025
    %1043 = vmatpush1.msra.mxu0 %v1024
    %1044 = vmatprep.subr.mxu0 %v1029
    %1045 = vmatpush1.msra.mxu0 %v1028
    %1046 = vmatprep.subr.mxu0 0.0
    %1047 = vmatpush1.msra.mxu0 0.0
    %1048 = vmatprep.subr.mxu0 0.0
    %1049 = vmatpush1.msra.mxu0 0.0
    %1050 = vmatprep.subr.mxu0 0.0
    %1051 = vmatpush1.msra.mxu0 0.0
    %1052 = vmatprep.subr.mxu0 0.0
    %1053 = vmatpush1.msra.mxu0 0.0
    %1054 = vmatprep.subr.mxu0 0.0
    %1055 = vmatpush1.msra.mxu0 0.0
    %1056 = vmatprep.subr.mxu0 0.0
    %1057 = vmatpush1.msra.mxu0 0.0
    %1058 = vmatprep.subr.mxu0 0.0
    %1059 = vmatpush1.msra.mxu0 0.0
    %1060 = vmatprep.subr.mxu0 0.0
    %1061 = vmatpush1.msra.mxu0 0.0
    %1062 = vmatprep.subr.mxu0 0.0
    %1063 = vmatpush1.msra.mxu0 0.0
    %1064 = vmatprep.subr.mxu0 0.0
    %1065 = vmatpush1.msra.mxu0 0.0
    %1066 = vmatprep.subr.mxu0 0.0
    %1067 = vmatpush1.msra.mxu0 0.0
    %1068 = vmatprep.subr.mxu0 0.0
    %1069 = vmatpush1.msra.mxu0 0.0
    %1070 = vmatprep.subr.mxu0 0.0
    %1071 = vmatpush1.msra.mxu0 0.0
    %1072 = vmatprep.subr.mxu0 0.0
    %1073 = vmatpush1.msra.mxu0 0.0
    %1074 = vmatprep.subr.mxu0 0.0
    %1075 = vmatpush1.msra.mxu0 0.0
    %1076 = vmatprep.subr.mxu0 0.0
    %1077 = vmatpush1.msra.mxu0 0.0
    %1078 = vmatprep.subr.mxu0 0.0
    %1079 = vmatpush1.msra.mxu0 0.0
    %1080 = vmatprep.subr.mxu0 0.0
    %1081 = vmatpush1.msra.mxu0 0.0
    %1082 = vmatprep.subr.mxu0 0.0
    %1083 = vmatpush1.msra.mxu0 0.0
    %1084 = vmatprep.subr.mxu0 0.0
    %1085 = vmatpush1.msra.mxu0 0.0
    %1086 = vmatprep.subr.mxu0 0.0
    %1087 = vmatpush1.msra.mxu0 0.0
    %1088 = vmatprep.subr.mxu0 0.0
    %1089 = vmatpush1.msra.mxu0 0.0
    %1090 = vmatprep.subr.mxu0 0.0
    %1091 = vmatpush1.msra.mxu0 0.0
    %1092 = vmatprep.subr.mxu0 0.0
    %1093 = vmatpush1.msra.mxu0 0.0
    %1094 = vmatprep.subr.mxu0 0.0
    %1095 = vmatpush1.msra.mxu0 0.0
    %1096 = vmatprep.subr.mxu0 0.0
    %1097 = vmatpush1.msra.mxu0 0.0
    %1098 = vmatprep.subr.mxu0 0.0
    %1099 = vmatpush1.msra.mxu0 0.0
    %1100 = vmatprep.subr.mxu0 0.0
    %1101 = vmatpush1.msra.mxu0 0.0
    %1102 = vmatprep.mubr.f32.mxu0 0.0
    %1103 = vmatmul.mubr.f32.gmra.mrb[0].mxu0 %v1036
    %v1104 = vpop.f32.mrb[0].mxu0
    %v1105 = vadd.f32 %v1034, %v1104
    %v1106 = vpop.f32.mrb[0].mxu0
    %v1107 = vadd.f32 %v1034, %v1106
    %1108 = vdwg.mxu0
    %1109 = vmatprep.subr.mxu0 %v1019
    %1110 = vmatpush1.msra.mxu0 %v1018
    %1111 = vmatprep.subr.mxu0 %v1023
    %1112 = vmatpush1.msra.mxu0 %v1022
    %1113 = vmatprep.subr.mxu0 %v1027
    %1114 = vmatpush1.msra.mxu0 %v1026
    %1115 = vmatprep.subr.mxu0 %v1031
    %1116 = vmatpush1.msra.mxu0 %v1030
    %1117 = vmatprep.subr.mxu0 0.0
    %1118 = vmatpush1.msra.mxu0 0.0
    %1119 = vmatprep.subr.mxu0 0.0
    %1120 = vmatpush1.msra.mxu0 0.0
    %1121 = vmatprep.subr.mxu0 0.0
    %1122 = vmatpush1.msra.mxu0 0.0
    %1123 = vmatprep.subr.mxu0 0.0
    %1124 = vmatpush1.msra.mxu0 0.0
    %1125 = vmatprep.subr.mxu0 0.0
    %1126 = vmatpush1.msra.mxu0 0.0
    %1127 = vmatprep.subr.mxu0 0.0
    %1128 = vmatpush1.msra.mxu0 0.0
    %1129 = vmatprep.subr.mxu0 0.0
    %1130 = vmatpush1.msra.mxu0 0.0
    %1131 = vmatprep.subr.mxu0 0.0
    %1132 = vmatpush1.msra.mxu0 0.0
    %1133 = vmatprep.subr.mxu0 0.0
    %1134 = vmatpush1.msra.mxu0 0.0
    %1135 = vmatprep.subr.mxu0 0.0
    %1136 = vmatpush1.msra.mxu0 0.0
    %1137 = vmatprep.subr.mxu0 0.0
    %1138 = vmatpush1.msra.mxu0 0.0
    %1139 = vmatprep.subr.mxu0 0.0
    %1140 = vmatpush1.msra.mxu0 0.0
    %1141 = vmatprep.subr.mxu0 0.0
    %1142 = vmatpush1.msra.mxu0 0.0
    %1143 = vmatprep.subr.mxu0 0.0
    %1144 = vmatpush1.msra.mxu0 0.0
    %1145 = vmatprep.subr.mxu0 0.0
    %1146 = vmatpush1.msra.mxu0 0.0
    %1147 = vmatprep.subr.mxu0 0.0
    %1148 = vmatpush1.msra.mxu0 0.0
    %1149 = vmatprep.subr.mxu0 0.0
    %1150 = vmatpush1.msra.mxu0 0.0
    %1151 = vmatprep.subr.mxu0 0.0
    %1152 = vmatpush1.msra.mxu0 0.0
    %1153 = vmatprep.subr.mxu0 0.0
    %1154 = vmatpush1.msra.mxu0 0.0
    %1155 = vmatprep.subr.mxu0 0.0
    %1156 = vmatpush1.msra.mxu0 0.0
    %1157 = vmatprep.subr.mxu0 0.0
    %1158 = vmatpush1.msra.mxu0 0.0
    %1159 = vmatprep.subr.mxu0 0.0
    %1160 = vmatpush1.msra.mxu0 0.0
    %1161 = vmatprep.subr.mxu0 0.0
    %1162 = vmatpush1.msra.mxu0 0.0
    %1163 = vmatprep.subr.mxu0 0.0
    %1164 = vmatpush1.msra.mxu0 0.0
    %1165 = vmatprep.subr.mxu0 0.0
    %1166 = vmatpush1.msra.mxu0 0.0
    %1167 = vmatprep.subr.mxu0 0.0
    %1168 = vmatpush1.msra.mxu0 0.0
    %1169 = vmatprep.subr.mxu0 0.0
    %1170 = vmatpush1.msra.mxu0 0.0
    %1171 = vmatprep.subr.mxu0 0.0
    %1172 = vmatpush1.msra.mxu0 0.0
    %1173 = vmatprep.mubr.f32.mxu0 0.0
    %1174 = vmatmul.mubr.f32.gmra.mrb[0].mxu0 %v1036
    %v1175 = vpop.f32.mrb[0].mxu0
    %v1176 = vadd.f32 %v1034, %v1175
    %v1177 = vpop.f32.mrb[0].mxu0
    %v1178 = vadd.f32 %v1034, %v1177
    %1179 = vdwg.mxu0
    %v1184 = vcombine.low %v1105, %v1107
    %v1185 = vcombine.low %v1176, %v1178
    %v1187 = vunpack.c.l.s4 1966171168
    %v1188 = vunpack.c.0.s8 %v1187
    %v1189 = vlaneseq
    %v1190 = vshrl.u32 %v1189, 7
    %v1191 = vsub.s32 %v1188, %v1190
    %v1192 = vrot.slane %v1184, %v1191
    %v1194 = vunpack.c.l.s4 1966171168
    %v1195 = vunpack.c.0.s8 %v1194
    %v1196 = vlaneseq
    %v1197 = vshrl.u32 %v1196, 7
    %v1198 = vsub.s32 %v1195, %v1197
    %v1199 = vrot.slane %v1185, %v1198
    %v1200 = vcombine.low %v1192, %v1199
    %v1202 = vunpack.c.l.s4 1966171168
    %v1203 = vunpack.c.0.s8 %v1202
    %v1204 = vlaneseq
    %v1205 = vshrl.u32 %v1204, 7
    %v1206 = vsub.s32 %v1203, %v1205
    %v1207 = vrot.slane %v1200, %v1206
    %v1209 = vlaneseq
    %vm1210 = vcmp.ge.s32.totalorder %v1209, 0
    %vm1211 = vcmp.lt.s32.totalorder %v1209, 512
    %vm1212 = vmand %vm1210, %vm1211
    %1213 = vst.msk [vmem:[#allocation9] sm:$0xf] %vm1212, %v1207
    // Predicated region
    $region58: #{tpu_custom_call.1} parent=1 // pred_check
      _
    $region59: #{tpu_custom_call.1} parent=1 // pred_check_branch
      %1215 = sbr.rel (0) target = $region61
    $region60: #{tpu_custom_call.1} parent=1 // pred_region
      %s1217 = ssub.s32 64, 64
      %1218 = vsyncadd [#allocation5], %s1217
      %s1220 = sshll.u32 [#allocation9], 4
      %s1221 = int_to_ptr.vmem [resolvable:$true] %s1220
      %1223 = dma.vmem_to_hbm [thread:$0]  %s1221, 64, %s11, [#allocation5]
    $region61: #{tpu_custom_call.1} parent=1 // pred_fallthru
      _
    // Predicated region
    $region62: #{tpu_custom_call.1} parent=1 // pred_check
      _
    $region63: #{tpu_custom_call.1} parent=1 // pred_check_branch
      %1225 = sbr.rel (0) target = $region65
    $region64: #{tpu_custom_call.1} parent=1 // pred_region
      %1226 = dma.done [#allocation5], 64
    $region65: #{tpu_custom_call.1} parent=1 // pred_fallthru
      _
    %1227 = vsyncpa [#allocation4], 1
    %1228 = vsyncpa [#allocation7], 1
    %1229 = vsyncpa [#allocation5], 1

</llo_original>
